<compile_context>
chip_gen: v5e
topology: v5e:2x2
jax: 0.10.0
libtpu: 0.0.40
codegen_flags: <defaults>
</compile_context>

<pallas_src>
import math
import numpy as np
import jax
import jax.numpy as jnp
from jax.experimental import pallas as pl
from jax.experimental.pallas import tpu as pltpu

_LANE = 128


def _round_up(x, m):
    return ((x + m - 1) // m) * m


def _vmem_caps():
    """Returns (scratch budget, vmem limit) in bytes, derived from the device."""
    try:
        cap = int(pltpu.get_tpu_info().vmem_capacity_bytes)
    except Exception:
        cap = 64 * 1024 * 1024          # conservative (v7x-sized) fallback
    return int(cap * 0.70), int(cap * 0.90)


def _pick_row_tile(rows, bytes_fn, budget, cap=128):
    """Largest row tile (preferring multiples of 8) dividing `rows` that fits."""
    # TODO(synk): for awkward `rows` (e.g. primes) switch to a cdiv grid with a
    # masked ragged last tile instead of falling back to tiny divisors.
    cands = [d for d in range(min(rows, cap), 0, -1) if rows % d == 0]
    pref = [d for d in cands if d % 8 == 0 or d == rows]
    order = pref + [d for d in cands if d not in pref]
    for d in order:
        if bytes_fn(d) <= budget:
            return d
    return order[-1]


# ----------------------------- 1x1 (lateral) conv ---------------------------

def _conv1x1_kernel(x_ref, w_ref, b_ref, o_ref):
    # x_ref: (TH, W, Cin)   w_ref: (Cin, Cout)   b_ref: (1, Cout)
    TH, W, Cin = x_ref.shape
    Cout = o_ref.shape[-1]
    x2 = x_ref[...].reshape(TH * W, Cin)
    y = jnp.dot(x2, w_ref[...], preferred_element_type=jnp.float32) + b_ref[...]
    o_ref[...] = y.reshape(TH, W, Cout).astype(o_ref.dtype)


def conv1x1(x, w, b):
    """Pointwise conv. x: (N,H,W,Cin), w: (Cin,Cout), b: (Cout,)."""
    N, H, W, Cin = x.shape
    Cout = w.shape[1]
    budget, vmem_limit = _vmem_caps()
    cin_l = _round_up(Cin, _LANE)
    cout_l = _round_up(Cout, _LANE)

    def bytes_fn(th):
        blocks = 2 * (th * W * cin_l + cin_l * cout_l + cout_l + th * W * cout_l)
        live = 2 * th * W * cout_l + th * W * cin_l
        return 4 * (blocks + live)

    TH = _pick_row_tile(H, bytes_fn, budget)
    cost = pl.CostEstimate(
        flops=2 * N * H * W * Cin * Cout,
        transcendentals=0,
        bytes_accessed=4 * (N * H * W * (Cin + Cout) + Cin * Cout + Cout),
    )
    return pl.pallas_call(
        _conv1x1_kernel,
        out_shape=jax.ShapeDtypeStruct((N, H, W, Cout), x.dtype),
        grid_spec=pltpu.PrefetchScalarGridSpec(
            num_scalar_prefetch=0,
            grid=(N, H // TH),
            in_specs=[
                pl.BlockSpec((None, TH, W, Cin), lambda n, t: (n, t, 0, 0)),
                pl.BlockSpec((Cin, Cout), lambda n, t: (0, 0)),
                pl.BlockSpec((1, Cout), lambda n, t: (0, 0)),
            ],
            out_specs=pl.BlockSpec((None, TH, W, Cout),
                                   lambda n, t: (n, t, 0, 0)),
        ),
        compiler_params=pltpu.CompilerParams(
            dimension_semantics=("parallel", "parallel"),
            vmem_limit_bytes=vmem_limit),
        cost_estimate=cost,
    )(x, w, b.reshape(1, Cout))


# -------------- fused nearest-resize + zero-pad + 3x3 conv ------------------

def _colsel_matrix(w_src, w_out):
    """(3*Wo, W) 0/1 matrix folding nearest col-resize, dx shift and zero pad.

    Row dx*Wo + x selects source column ((x+dx-1)*W)//Wo when the padded
    column x+dx-1 lies in [0, Wo); otherwise the row is all-zero (the pad).
    """
    cols = (np.arange(w_out) * w_src) // w_out
    s = np.zeros((3, w_out, w_src), np.float32)
    for dx in range(3):
        for x in range(w_out):
            k = x + dx - 1
            if 0 <= k < w_out:
                s[dx, x, cols[k]] = 1.0
    return jnp.asarray(s.reshape(3 * w_out, w_src))


def fused_resize_conv3x3(x, w_hwio, b, out_h, out_w):
    """nearest-resize to (out_h, out_w) then 3x3 conv (pad 1, stride 1), fused.

    x: (N, H, W, C) source (NOT resized, NOT padded)
    w_hwio: (3, 3, C, Cout), b: (Cout,)
    """
    N, H, W, C = x.shape
    Cout = w_hwio.shape[-1]
    Ho, Wo = int(out_h), int(out_w)
    budget, vmem_limit = _vmem_caps()
    c_l = _round_up(C, _LANE)
    c3_l = _round_up(3 * C, _LANE)
    co_l = _round_up(Cout, _LANE)

    def bytes_fn(th):
        # constant-index operands are still double-buffered by BlockSpec (2x)
        blocks = 2 * (H * W * c_l + 3 * Wo * _round_up(W, _LANE)
                      + 3 * 3 * C * co_l + co_l + th * Wo * co_l)
        scratch = H * Wo * c3_l + (th + 2) * Wo * c3_l
        live = 3 * th * Wo * c3_l + 2 * th * Wo * co_l   # tap operands + acc
        return 4 * (blocks + scratch + live)

    TH = _pick_row_tile(Ho, bytes_fn, budget)
    n_tiles = Ho // TH
    s_all = _colsel_matrix(W, Wo)            # (3*Wo, W) constant
    w3 = w_hwio.reshape(3, 3 * C, Cout)      # [dy, dx*C + c, o]

    def kernel(x_ref, s_ref, w_ref, b_ref, o_ref, pcache_ref, rbuf_ref):
        # x_ref   : (H, W, C)            whole source image (resident per batch)
        # s_ref   : (3*Wo, W)            column resize/shift/pad selection
        # w_ref   : (3, 3C, Cout)        per-dy weights, dx packed into K
        # b_ref   : (1, Cout)
        # o_ref   : (TH, Wo, Cout)       output row tile
        # pcache  : (H, Wo, 3C)          per-source-row resized cache (persists)
        # rbuf    : (TH+2, Wo, 3C)       gathered padded rows for this tile
        t = pl.program_id(1)

        # ---- stage A: resize every source row ONCE per batch element -------
        @pl.when(t == 0)
        def _fill_cache():
            s_mat = s_ref[...]                               # hoisted
            for h in range(H):                               # static unroll
                row = x_ref[h].astype(jnp.float32)           # (W, C)
                pc = jnp.dot(s_mat, row,
                             preferred_element_type=jnp.float32)   # (3Wo, C)
                # dx-major lane packing: pcache[h, x, dx*C + c]
                pcache_ref[h, :, 0:C] = pc[0:Wo]
                pcache_ref[h, :, C:2 * C] = pc[Wo:2 * Wo]
                pcache_ref[h, :, 2 * C:3 * C] = pc[2 * Wo:3 * Wo]

        # ---- stage B: gather the TH+2 padded rows of this tile (copies) ----
        r0 = t * TH
        for i in range(TH + 2):                              # static unroll
            j = r0 - 1 + i                                   # padded output row
            sr = (jnp.clip(j, 0, Ho - 1) * H) // Ho          # nearest source row
            row = pcache_ref[sr]                             # (Wo, 3C)
            if i == 0 or i == TH + 1:                        # only rows that can pad
                valid = jnp.logical_and(j >= 0, j < Ho)
                row = row * valid.astype(jnp.float32)
            rbuf_ref[i] = row

        # ---- 3 fused tap matmuls (K = 3C), one per dy -----------------------
        acc = jnp.dot(rbuf_ref[0:TH].reshape(TH * Wo, 3 * C), w_ref[0],
                      preferred_element_type=jnp.float32)
        acc = acc + jnp.dot(rbuf_ref[1:TH + 1].reshape(TH * Wo, 3 * C), w_ref[1],
                            preferred_element_type=jnp.float32)
        acc = acc + jnp.dot(rbuf_ref[2:TH + 2].reshape(TH * Wo, 3 * C), w_ref[2],
                            preferred_element_type=jnp.float32)
        acc = acc + b_ref[...]
        o_ref[...] = acc.reshape(TH, Wo, Cout).astype(o_ref.dtype)

    cost = pl.CostEstimate(
        flops=int(2 * 9 * N * Ho * Wo * C * Cout        # conv taps
                  + 2 * N * H * 3 * Wo * W * C),        # resize, once per batch
        transcendentals=0,
        bytes_accessed=4 * (N * H * W * C + N * Ho * Wo * Cout
                            + 9 * C * Cout + Cout + 3 * Wo * W),
    )

    return pl.pallas_call(
        kernel,
        out_shape=jax.ShapeDtypeStruct((N, Ho, Wo, Cout), x.dtype),
        grid_spec=pltpu.PrefetchScalarGridSpec(
            num_scalar_prefetch=0,
            grid=(N, n_tiles),
            in_specs=[
                pl.BlockSpec((None, H, W, C), lambda n, t: (n, 0, 0, 0)),
                pl.BlockSpec((3 * Wo, W), lambda n, t: (0, 0)),
                pl.BlockSpec((3, 3 * C, Cout), lambda n, t: (0, 0, 0)),
                pl.BlockSpec((1, Cout), lambda n, t: (0, 0)),
            ],
            out_specs=pl.BlockSpec((None, TH, Wo, Cout),
                                   lambda n, t: (n, t, 0, 0)),
            scratch_shapes=[
                pltpu.VMEM((H, Wo, 3 * C), jnp.float32),        # pcache
                pltpu.VMEM((TH + 2, Wo, 3 * C), jnp.float32),   # rbuf
            ],
        ),
        compiler_params=pltpu.CompilerParams(
            # row-tile axis must be "arbitrary": the per-batch cache is filled
            # at t == 0 and reused sequentially; the batch axis stays parallel
            # so megacore (v7x) still splits work across TensorCores.
            dimension_semantics=("parallel", "arbitrary"),
            vmem_limit_bytes=vmem_limit),
        cost_estimate=cost,
    )(x, s_all, w3, b.reshape(1, Cout))


# ------------------------------- glue ops ----------------------------------

def nearest_resize_nhwc(x, out_h, out_w):
    # PyTorch F.interpolate(mode='nearest'): src = floor(dst * in / out)
    N, H, W, C = x.shape
    rows = (jnp.arange(out_h) * H) // out_h
    cols = (jnp.arange(out_w) * W) // out_w
    return x[:, rows][:, :, cols]


# ----------------------------- module wrapper -------------------------------

def _xavier_uniform(key, shape_hwio):
    kh, kw, cin, cout = shape_hwio
    fan_in, fan_out = cin * kh * kw, cout * kh * kw
    bound = math.sqrt(6.0 / (fan_in + fan_out))
    return jax.random.uniform(key, shape_hwio, jnp.float32, -bound, bound)


class MultiLevelNeckPallas:
    def __init__(self, in_channels, out_channels, adjust_channels=False,
                 scales=(0.5, 1, 2, 4), key=None):
        assert isinstance(in_channels, list)
        self.in_channels = in_channels
        self.out_channels = out_channels
        self.scales = list(scales)
        self.num_outs = len(scales)
        self.cpad = _round_up(out_channels, _LANE)    # lane-dense channel dim
        key = jax.random.PRNGKey(42) if key is None else key

        self.lateral = None
        if adjust_channels:
            self.lateral = []
            for cin in in_channels:
                key, kw_, kb_ = jax.random.split(key, 3)
                w = _xavier_uniform(kw_, (1, 1, cin, out_channels))[0, 0]
                b = jax.random.uniform(kb_, (out_channels,), jnp.float32,
                                       -0.1, 0.1)
                self.lateral.append((w, b))

        self.convs = []
        for _ in range(self.num_outs):
            key, kw_, kb_ = jax.random.split(key, 3)
            w = _xavier_uniform(kw_, (3, 3, out_channels, out_channels))
            b = jax.random.uniform(kb_, (out_channels,), jnp.float32, -0.1, 0.1)
            self.convs.append((w, b))

        # Channel-padded (lane-dense) copies used by the Pallas kernels.  The
        # zero padding keeps the padded math bit-exact vs. the unpadded ref.
        cp, co = self.cpad, out_channels
        if self.lateral is not None:
            self.lateral_pad = [
                (jnp.pad(w, ((0, 0), (0, cp - co))), jnp.pad(b, (0, cp - co)))
                for (w, b) in self.lateral]
        self.convs_pad = [
            (jnp.pad(w, ((0, 0), (0, 0), (0, cp - co), (0, cp - co))),
             jnp.pad(b, (0, cp - co)))
            for (w, b) in self.convs]

    def __call__(self, inputs):
        # inputs: list of NCHW arrays (PyTorch convention)
        assert len(inputs) == len(self.in_channels)
        xs = [jnp.transpose(x, (0, 2, 3, 1)) for x in inputs]    # -> NHWC
        if self.lateral is not None:
            xs = [conv1x1(xs[i], w, b)                           # (N,H,W,cpad)
                  for i, (w, b) in enumerate(self.lateral_pad)]
        else:
            assert all(x.shape[-1] == self.out_channels for x in xs)
            xs = [jnp.pad(x, ((0, 0), (0, 0), (0, 0),
                              (0, self.cpad - self.out_channels))) for x in xs]
        if len(xs) != self.num_outs:
            xs = [xs[0]] * self.num_outs
        outs = []
        for i in range(self.num_outs):
            ho = int(xs[i].shape[1] * self.scales[i])
            wo = int(xs[i].shape[2] * self.scales[i])
            w3, b3 = self.convs_pad[i]
            y = fused_resize_conv3x3(xs[i], w3, b3, ho, wo)      # (N,Ho,Wo,cpad)
            y = y[..., :self.out_channels]
            outs.append(jnp.transpose(y, (0, 3, 1, 2)))          # -> NCHW
        return outs

    # pure-JAX reference (lax convs + gather resize) for verification
    def reference(self, inputs):
        xs = [jnp.transpose(x, (0, 2, 3, 1)) for x in inputs]
        if self.lateral is not None:
            xs = [jax.lax.conv_general_dilated(
                      xs[i], w[None, None], (1, 1), 'VALID',
                      dimension_numbers=('NHWC', 'HWIO', 'NHWC')) + b
                  for i, (w, b) in enumerate(self.lateral)]
        if len(xs) != self.num_outs:
            xs = [xs[0]] * self.num_outs
        outs = []
        for i in range(self.num_outs):
            h = int(xs[i].shape[1] * self.scales[i])
            w = int(xs[i].shape[2] * self.scales[i])
            xr = nearest_resize_nhwc(xs[i], h, w)
            w3, b3 = self.convs[i]
            y = jax.lax.conv_general_dilated(
                xr, w3, (1, 1), ((1, 1), (1, 1)),
                dimension_numbers=('NHWC', 'HWIO', 'NHWC')) + b3
            outs.append(jnp.transpose(y, (0, 3, 1, 2)))
        return outs


# ----------------------------------- main -----------------------------------

if __name__ == "__main__":
    key = jax.random.PRNGKey(0)
    # one backbone feature map: N=2, C=4, H=W=16 (NCHW like the torch module)
    x = jax.random.normal(key, (2, 4, 16, 16), dtype=jnp.float32)

    neck = MultiLevelNeckPallas(in_channels=[4], out_channels=8,
                                adjust_channels=True, scales=[0.5, 1, 2, 4])

    outs = neck([x])
    outs = [jax.block_until_ready(o) for o in outs]

    refs = neck.reference([x])
    expected_hw = [8, 16, 32, 64]
    for o, r, hw in zip(outs, refs, expected_hw):
        assert o.shape == (2, 8, hw, hw), o.shape
        assert jnp.allclose(o, r, atol=1e-4, rtol=1e-4), \
            f"mismatch: max err {jnp.abs(o - r).max()}"

    print("KERNEL_OK")
</pallas_src>

<mosaic_0001>
module attributes {stable_mosaic.version = 11 : i64} {
  func.func @_conv1x1_kernel(%arg0: i32, %arg1: i32, %arg2: memref<1x16x16x4xf32, #tpu.memory_space<vmem>>, %arg3: memref<4x128xf32, #tpu.memory_space<vmem>>, %arg4: memref<1x128xf32, #tpu.memory_space<vmem>>, %arg5: memref<1x16x16x128xf32, #tpu.memory_space<vmem>>) attributes {dimension_semantics = [#tpu.dimension_semantics<parallel>, #tpu.dimension_semantics<parallel>], iteration_bounds = array<i64: 2, 1>, scalar_prefetch = 0 : i64, scratch_operands = 0 : i64, tpu.core_type = #tpu.core_type<tc>, window_params = [{transform_indices = @transform_0, window_bounds = array<i64: 1, 16, 16, 4>}, {pipeline_mode = #tpu.pipeline_mode<synchronous>, transform_indices = @transform_1, window_bounds = array<i64: 4, 128>}, {pipeline_mode = #tpu.pipeline_mode<synchronous>, transform_indices = @transform_2, window_bounds = array<i64: 1, 128>}, {transform_indices = @transform_3, window_bounds = array<i64: 1, 16, 16, 128>}]} {
    %c0 = arith.constant 0 : index
    %c0_0 = arith.constant 0 : index
    %c0_1 = arith.constant 0 : index
    %c0_2 = arith.constant 0 : index
    %0 = vector.load %arg2[%c0, %c0_0, %c0_1, %c0_2] : memref<1x16x16x4xf32, #tpu.memory_space<vmem>>, vector<1x16x16x4xf32>
    %1 = vector.shape_cast %0 : vector<1x16x16x4xf32> to vector<16x16x4xf32>
    %2 = vector.shape_cast %1 : vector<16x16x4xf32> to vector<256x4xf32>
    %c0_3 = arith.constant 0 : index
    %c0_4 = arith.constant 0 : index
    %3 = vector.load %arg3[%c0_3, %c0_4] : memref<4x128xf32, #tpu.memory_space<vmem>>, vector<4x128xf32>
    %cst = arith.constant dense<0.000000e+00> : vector<256x128xf32>
    %4 = tpu.matmul %2, %3, %cst {dimension_numbers = #tpu.dot_dimension_numbers<[1], [0], [0], [1], [0, 0, 1, 1], [], []>} : vector<256x4xf32>, vector<4x128xf32>, vector<256x128xf32> -> vector<256x128xf32>
    %c0_5 = arith.constant 0 : index
    %c0_6 = arith.constant 0 : index
    %5 = vector.load %arg4[%c0_5, %c0_6] : memref<1x128xf32, #tpu.memory_space<vmem>>, vector<1x128xf32>
    %6 = vector.broadcast %5 : vector<1x128xf32> to vector<256x128xf32>
    %7 = arith.addf %4, %6 : vector<256x128xf32>
    %8 = vector.shape_cast %7 : vector<256x128xf32> to vector<16x16x128xf32>
    %c0_7 = arith.constant 0 : index
    %c0_8 = arith.constant 0 : index
    %c0_9 = arith.constant 0 : index
    %c0_10 = arith.constant 0 : index
    %9 = vector.load %arg5[%c0_7, %c0_8, %c0_9, %c0_10] : memref<1x16x16x128xf32, #tpu.memory_space<vmem>>, vector<1x16x16x128xf32>
    %10 = vector.shape_cast %9 : vector<1x16x16x128xf32> to vector<16x16x128xf32>
    %11 = vector.shape_cast %8 : vector<16x16x128xf32> to vector<1x16x16x128xf32>
    tpu.vector_store %arg5[%c0_7, %c0_8, %c0_9, %c0_10], %11 {strides = array<i32>} : memref<1x16x16x128xf32, #tpu.memory_space<vmem>>, vector<1x16x16x128xf32>,
    return
  }
  func.func @transform_0(%arg0: i32, %arg1: i32) -> (i32, i32, i32, i32) {
    %c0_i32 = arith.constant 0 : i32
    %c0_i32_0 = arith.constant 0 : i32
    %c0_i32_1 = arith.constant 0 : i32
    return %arg0, %arg1, %c0_i32, %c0_i32_0 : i32, i32, i32, i32
  }
  func.func @transform_1(%arg0: i32, %arg1: i32) -> (i32, i32) {
    %c0_i32 = arith.constant 0 : i32
    %c0_i32_0 = arith.constant 0 : i32
    %c0_i32_1 = arith.constant 0 : i32
    return %c0_i32, %c0_i32_0 : i32, i32
  }
  func.func @transform_2(%arg0: i32, %arg1: i32) -> (i32, i32) {
    %c0_i32 = arith.constant 0 : i32
    %c0_i32_0 = arith.constant 0 : i32
    %c0_i32_1 = arith.constant 0 : i32
    return %c0_i32, %c0_i32_0 : i32, i32
  }
  func.func @transform_3(%arg0: i32, %arg1: i32) -> (i32, i32, i32, i32) {
    %c0_i32 = arith.constant 0 : i32
    %c0_i32_0 = arith.constant 0 : i32
    %c0_i32_1 = arith.constant 0 : i32
    return %arg0, %arg1, %c0_i32, %c0_i32_0 : i32, i32, i32, i32
  }
}

</mosaic_0001>

<llo_original>
// kernel: tpu_custom_call.1
$region0: #{tpu_custom_call.1}
  #allocation0 [shape = 'u32[]', space=smem, size = 0x4, offset = 0x4, fixed_abs, tag = 'smem constant byte address 0x4 - core index']
  #allocation1 [shape = 'u32[72,128]{1,0:T(1,128)}', space=vmem, size = 0x9000, scoped, tag = 'internal scratch']
  %s0 = inlined_call_operand.vmem [shape: f32[2,16,16,4], index: 0, kind: input, shape index: {}]
  %s1 = inlined_call_operand.vmem [shape: f32[4,128], index: 1, kind: input, shape index: {}]
  %s2 = inlined_call_operand.vmem [shape: f32[1,128], index: 2, kind: input, shape index: {}]
  %s3 = inlined_call_operand.hbm [shape: f32[2,16,16,128], index: 3, kind: output, shape index: {}]
  %s4 = sld [smem:[#allocation0]]
  $region45: #{tpu_custom_call.1} parent=0
    _
  %s6 = ssub.s32 1, %s4
  %s7 = scalar_select 0, %s6, %s4
  $region1: #{tpu_custom_call.1} parent=0
    #allocation2 [shape = 'u8[262144]{0}', space=vmem, size = 0x40000, scoped, tag = 'output window, operand 0']
    #allocation3 [shape = 's32[2]{0}', space=sflag, size = 0x8, scoped, tag = 'scoped memory for tpu_custom_call.1']
    %8 = vsyncpa [#allocation3], 0
    %s9 = scalar_lea.sflag [#allocation3], 1
    %10 = vsyncpa %s9, 0
    loop: start=0, step=1, limit=4
    $region2: #{tpu_custom_call.1} parent=1 // loop_pre_header
      _
    $region3: #{tpu_custom_call.1} parent=1 // loop_header
      %s12 = sphi 0, %s16
      %p13 = scmp.ge.s32.totalorder %s12, 4
      %s19 = sphi 0, %s31
      %s20 = sphi 0, %s27
      %s21 = sphi 0, %s19
      %s22 = sphi 0, %s20
      %s23 = sphi 0, %s21
      %s24 = sphi 0, %s22
      %s36 = sphi 0, %s38
      %s39 = sphi 0, %s36
      %s40 = sphi 0, %s39
      %s56 = sphi 0, %s40
      %s60 = sphi 0, %s60
      %s62 = sphi 0, %s60
      %s63 = sphi 0, %s62
      %s77 = sphi 0, %s63
      %s81 = sphi 0, %s81
      %s83 = sphi 0, %s81
      %s84 = sphi 0, %s83
      %s98 = sphi 0, %s84
      %s106 = sphi 0, %s108
      %s109 = sphi 0, %s106
      %s110 = sphi 0, %s109
      %s126 = sphi 0, %s110
    $region4: #{tpu_custom_call.1} parent=1 // loop_header_branch
      %15 = sbr.rel (%p13) target = $region8
    $region5: #{tpu_custom_call.1} parent=1 // loop_body
      %s17 = ssub.s32 %s12, 1
      %s18 = ssub.s32 %s12, 2
      %s25 = sadd.s32 1, %s20
      %p26 = scmp.ge.s32.totalorder %s25, 1
      %s27 = scalar_select %p26, 0, %s25
      %s28 = sadd.s32 1, %s19
      %s29 = scalar_select %p26, %s28, %s19
      %p30 = scmp.ge.s32.totalorder %s29, 2
      %s31 = scalar_select %p30, 0, %s29
      %s32 = ssub.s32 %s19, %s31
      %s33 = ssub.s32 %s20, %s27
      %s34 = sor.u32 %s32, %s33
      %p35 = scmp.eq.s32.totalorder %s34, 0
      %s37 = sadd.s32 %s36, 1
      %s38 = scalar_select %p35, %s36, %s37
      %p41 = pneg %p35
      %p42 = scmp.eq.s32.totalorder %s12, 1
      %p43 = por %p41, %p42
      %p44 = scmp.ne.s32.totalorder %s36, %s39
      %p45 = scmp.eq.s32.totalorder %s12, 0
      %p46 = por %p44, %p45
      %p47 = scmp.ne.s32.totalorder %s36, %s39
      %p48 = scmp.eq.s32.totalorder %s17, 1
      %p49 = por %p47, %p48
      %p50 = scmp.ne.s32.totalorder %s39, %s40
      %p51 = scmp.eq.s32.totalorder %s17, 0
      %p52 = por %p50, %p51
      %p53 = scmp.ne.s32.totalorder %s39, %s40
      %p54 = scmp.eq.s32.totalorder %s18, 1
      %p55 = por %p53, %p54
      %p57 = scmp.ne.s32.totalorder %s40, %s56
      %p58 = scmp.eq.s32.totalorder %s18, 0
      %p59 = por %p57, %p58
      %s61 = sadd.s32 %s60, 1
      %p64 = scmp.eq.s32.totalorder %s12, 1
      %p65 = scmp.ne.s32.totalorder %s60, %s62
      %p66 = scmp.eq.s32.totalorder %s12, 0
      %p67 = por %p65, %p66
      %p68 = scmp.ne.s32.totalorder %s60, %s62
      %p69 = scmp.eq.s32.totalorder %s17, 1
      %p70 = por %p68, %p69
      %p71 = scmp.ne.s32.totalorder %s62, %s63
      %p72 = scmp.eq.s32.totalorder %s17, 0
      %p73 = por %p71, %p72
      %p74 = scmp.ne.s32.totalorder %s62, %s63
      %p75 = scmp.eq.s32.totalorder %s18, 1
      %p76 = por %p74, %p75
      %p78 = scmp.ne.s32.totalorder %s63, %s77
      %p79 = scmp.eq.s32.totalorder %s18, 0
      %p80 = por %p78, %p79
      %s82 = sadd.s32 %s81, 1
      %p85 = scmp.eq.s32.totalorder %s12, 1
      %p86 = scmp.ne.s32.totalorder %s81, %s83
      %p87 = scmp.eq.s32.totalorder %s12, 0
      %p88 = por %p86, %p87
      %p89 = scmp.ne.s32.totalorder %s81, %s83
      %p90 = scmp.eq.s32.totalorder %s17, 1
      %p91 = por %p89, %p90
      %p92 = scmp.ne.s32.totalorder %s83, %s84
      %p93 = scmp.eq.s32.totalorder %s17, 0
      %p94 = por %p92, %p93
      %p95 = scmp.ne.s32.totalorder %s83, %s84
      %p96 = scmp.eq.s32.totalorder %s18, 1
      %p97 = por %p95, %p96
      %p99 = scmp.ne.s32.totalorder %s84, %s98
      %p100 = scmp.eq.s32.totalorder %s18, 0
      %p101 = por %p99, %p100
      %s102 = ssub.s32 %s19, %s31
      %s103 = ssub.s32 %s20, %s27
      %s104 = sor.u32 %s102, %s103
      %p105 = scmp.eq.s32.totalorder %s104, 0
      %s107 = sadd.s32 %s106, 1
      %s108 = scalar_select %p105, %s106, %s107
      %p111 = pneg %p105
      %p112 = scmp.eq.s32.totalorder %s12, 1
      %p113 = por %p111, %p112
      %p114 = scmp.ne.s32.totalorder %s106, %s109
      %p115 = scmp.eq.s32.totalorder %s12, 0
      %p116 = por %p114, %p115
      %p117 = scmp.ne.s32.totalorder %s106, %s109
      %p118 = scmp.eq.s32.totalorder %s17, 1
      %p119 = por %p117, %p118
      %p120 = scmp.ne.s32.totalorder %s109, %s110
      %p121 = scmp.eq.s32.totalorder %s17, 0
      %p122 = por %p120, %p121
      %p123 = scmp.ne.s32.totalorder %s109, %s110
      %p124 = scmp.eq.s32.totalorder %s18, 1
      %p125 = por %p123, %p124
      %p127 = scmp.ne.s32.totalorder %s110, %s126
      %p128 = scmp.eq.s32.totalorder %s18, 0
      %p129 = por %p127, %p128
      %p130 = scmp.le.s32.totalorder 1, %s12
      %p131 = scmp.lt.s32.totalorder %s12, 3
      %p132 = pnand %p130, %p131
      %p133 = pneg %p132
      // Predicated region
      $region9: #{tpu_custom_call.1} parent=5 // pred_check
        _
      $region10: #{tpu_custom_call.1} parent=5 // pred_check_branch
        %135 = sbr.rel (%p132) target = $region12
      $region11: #{tpu_custom_call.1} parent=5 // pred_region
        %s136 = ssub.s32 %s12, 1
        // Predicated region
        $region13: #{tpu_custom_call.1} parent=11 // pred_check
          %p137 = pneg %p73
        $region14: #{tpu_custom_call.1} parent=11 // pred_check_branch
          %139 = sbr.rel (%p137) target = $region16
        $region15: #{tpu_custom_call.1} parent=11 // pred_region
          _
        $region16: #{tpu_custom_call.1} parent=11 // pred_fallthru
          _
        // Predicated region
        $region17: #{tpu_custom_call.1} parent=11 // pred_check
          %p140 = pneg %p94
        $region18: #{tpu_custom_call.1} parent=11 // pred_check_branch
          %142 = sbr.rel (%p140) target = $region20
        $region19: #{tpu_custom_call.1} parent=11 // pred_region
          _
        $region20: #{tpu_custom_call.1} parent=11 // pred_fallthru
          _
      $region12: #{tpu_custom_call.1} parent=5 // pred_fallthru
        _
      %p143 = scmp.lt.s32.totalorder %s12, 2
      // Predicated region
      $region21: #{tpu_custom_call.1} parent=5 // pred_check
        %p144 = pneg %p143
      $region22: #{tpu_custom_call.1} parent=5 // pred_check_branch
        %146 = sbr.rel (%p144) target = $region24
      $region23: #{tpu_custom_call.1} parent=5 // pred_region
        // Predicated region
        $region25: #{tpu_custom_call.1} parent=23 // pred_check
          %p147 = pneg %p46
        $region26: #{tpu_custom_call.1} parent=23 // pred_check_branch
          %149 = sbr.rel (%p147) target = $region28
        $region27: #{tpu_custom_call.1} parent=23 // pred_region
          %s150 = smul.u32 16, %s20
          %p151 = scmp.lt.s32.totalorder %s19, 1
          %s152 = scalar_select %p151, %s19, 1
          %p153 = scmp.lt.s32.totalorder %s150, 15
          %s154 = scalar_select %p153, %s150, 15
          %s155 = smul.addr %s154, 2
          %s156 = smul.addr %s152, 32
          %s157 = sadd.s32 %s155, %s156
          %s158 = smul.addr %s157, 8
          %s159 = scalar_lea.vmem %s0, %s158
          %s160 = smul.u32 16, %s20
        $region28: #{tpu_custom_call.1} parent=23 // pred_fallthru
          _
      $region24: #{tpu_custom_call.1} parent=5 // pred_fallthru
        _
      %p161 = scmp.le.s32.totalorder 1, %s12
      %p162 = scmp.lt.s32.totalorder %s12, 3
      %p163 = pnand %p161, %p162
      %p164 = pneg %p163
      // Predicated region
      $region29: #{tpu_custom_call.1} parent=5 // pred_check
        _
      $region30: #{tpu_custom_call.1} parent=5 // pred_check_branch
        %166 = sbr.rel (%p163) target = $region32
      $region31: #{tpu_custom_call.1} parent=5 // pred_region
        %s167 = ssub.s32 %s12, 1
        %s168 = smul.u32 16, %s22
        %p169 = scmp.lt.s32.totalorder %s21, 1
        %s170 = scalar_select %p169, %s21, 1
        %p171 = scmp.lt.s32.totalorder %s168, 15
        %s172 = scalar_select %p171, %s168, 15
        %s173 = smul.addr %s172, 2
        %s174 = smul.addr %s170, 32
        %s175 = sadd.s32 %s173, %s174
        %s176 = smul.addr %s175, 8
        %s177 = scalar_lea.vmem %s0, %s176
        %p178 = pneg %p52
        %p179 = pneg %p49
        %p180 = pneg %p73
        %p181 = pneg %p70
        %p182 = pneg %p94
        %p183 = pneg %p91
        %p184 = pneg %p122
        %p185 = pneg %p119
        %s186 = sand.u32 %s109, 1
        %s187 = scalar_lea.sflag [#allocation3], %s186
        %s188 = sand.u32 %s109, 1
        %s189 = smul.addr %s188, 256
        %s190 = scalar_lea.vmem [#allocation2], %s189
        %s191 = smul.u32 16, %s22
        %p192 = scmp.lt.s32.totalorder %s21, 1
        %s193 = scalar_select %p192, %s21, 1
        %p194 = scmp.lt.s32.totalorder %s191, 15
        %s195 = scalar_select %p194, %s191, 15
        %s196 = smul.addr %s195, 2
        %s197 = smul.addr %s193, 32
        %s198 = sadd.s32 %s196, %s197
        %s199 = smul.addr %s198, 8
        %s200 = scalar_lea.vmem %s0, %s199
        %s201 = smul.u32 16, %s22
        %s202 = smul.u32 16, %s22
        %v203 = vld [vmem:[%s200] sm:$0xff]
        %v204 = vld [vmem:[%s200 + $0x8] sm:$0xff]
        %v205 = vld [vmem:[%s200 + $0x10] sm:$0xff]
        %v206 = vld [vmem:[%s200 + $0x18] sm:$0xff]
        %v207 = vld [vmem:[%s200 + $0x20] sm:$0xff]
        %v208 = vld [vmem:[%s200 + $0x28] sm:$0xff]
        %v209 = vld [vmem:[%s200 + $0x30] sm:$0xff]
        %v210 = vld [vmem:[%s200 + $0x38] sm:$0xff]
        %v211 = vld [vmem:[%s200 + $0x40] sm:$0xff]
        %v212 = vld [vmem:[%s200 + $0x48] sm:$0xff]
        %v213 = vld [vmem:[%s200 + $0x50] sm:$0xff]
        %v214 = vld [vmem:[%s200 + $0x58] sm:$0xff]
        %v215 = vld [vmem:[%s200 + $0x60] sm:$0xff]
        %v216 = vld [vmem:[%s200 + $0x68] sm:$0xff]
        %v217 = vld [vmem:[%s200 + $0x70] sm:$0xff]
        %v218 = vld [vmem:[%s200 + $0x78] sm:$0xff]
        %v219 = vld [vmem:[%s200 + $0x80] sm:$0xff]
        %v220 = vld [vmem:[%s200 + $0x88] sm:$0xff]
        %v221 = vld [vmem:[%s200 + $0x90] sm:$0xff]
        %v222 = vld [vmem:[%s200 + $0x98] sm:$0xff]
        %v223 = vld [vmem:[%s200 + $0xa0] sm:$0xff]
        %v224 = vld [vmem:[%s200 + $0xa8] sm:$0xff]
        %v225 = vld [vmem:[%s200 + $0xb0] sm:$0xff]
        %v226 = vld [vmem:[%s200 + $0xb8] sm:$0xff]
        %v227 = vld [vmem:[%s200 + $0xc0] sm:$0xff]
        %v228 = vld [vmem:[%s200 + $0xc8] sm:$0xff]
        %v229 = vld [vmem:[%s200 + $0xd0] sm:$0xff]
        %v230 = vld [vmem:[%s200 + $0xd8] sm:$0xff]
        %v231 = vld [vmem:[%s200 + $0xe0] sm:$0xff]
        %v232 = vld [vmem:[%s200 + $0xe8] sm:$0xff]
        %v233 = vld [vmem:[%s200 + $0xf0] sm:$0xff]
        %v234 = vld [vmem:[%s200 + $0xf8] sm:$0xff]
        %v235 = vld [vmem:[%s1] sm:$0xf]
        %v236 = vld [vmem:[%s2] sm:$0x1]
        %v238 = vperm.slane %v236, 0
        %vm240 = vcmask 31744
        %v242 = vsel %vm240, %v203, 0
        %v245 = vsel %vm240, %v204, 0
        %v248 = vsel %vm240, %v205, 0
        %v251 = vsel %vm240, %v206, 0
        %v254 = vsel %vm240, %v207, 0
        %v257 = vsel %vm240, %v208, 0
        %v260 = vsel %vm240, %v209, 0
        %v263 = vsel %vm240, %v210, 0
        %v266 = vsel %vm240, %v211, 0
        %v269 = vsel %vm240, %v212, 0
        %v272 = vsel %vm240, %v213, 0
        %v275 = vsel %vm240, %v214, 0
        %v278 = vsel %vm240, %v215, 0
        %v281 = vsel %vm240, %v216, 0
        %v284 = vsel %vm240, %v217, 0
        %v287 = vsel %vm240, %v218, 0
        %v290 = vsel %vm240, %v219, 0
        %v293 = vsel %vm240, %v220, 0
        %v296 = vsel %vm240, %v221, 0
        %v299 = vsel %vm240, %v222, 0
        %v302 = vsel %vm240, %v223, 0
        %v305 = vsel %vm240, %v224, 0
        %v308 = vsel %vm240, %v225, 0
        %v311 = vsel %vm240, %v226, 0
        %v314 = vsel %vm240, %v227, 0
        %v317 = vsel %vm240, %v228, 0
        %v320 = vsel %vm240, %v229, 0
        %v323 = vsel %vm240, %v230, 0
        %v326 = vsel %vm240, %v231, 0
        %v329 = vsel %vm240, %v232, 0
        %v332 = vsel %vm240, %v233, 0
        %v335 = vsel %vm240, %v234, 0
        %vm337 = vcmask 1043456
        %v339 = vsel %vm337, %v235, 0
        %341 = vmatpush.msra.mxu0 0.0
        %342 = vmatpush.msra.mxu0 0.0
        %343 = vmatpush.msra.mxu0 0.0
        %344 = vmatpush.msra.mxu0 0.0
        %345 = vmatpush.msra.mxu0 0.0
        %346 = vmatpush.msra.mxu0 0.0
        %347 = vmatpush.msra.mxu0 0.0
        %348 = vmatpush.msra.mxu0 0.0
        %349 = vmatpush.msra.mxu0 0.0
        %350 = vmatpush.msra.mxu0 0.0
        %351 = vmatpush.msra.mxu0 0.0
        %352 = vmatpush.msra.mxu0 0.0
        %353 = vmatpush.msra.mxu0 0.0
        %354 = vmatpush.msra.mxu0 0.0
        %355 = vmatpush.msra.mxu0 0.0
        %356 = vmatpush.msra.mxu0 %v339
        %357 = vmatmul.f32.gmra.mxu0 %v242
        %v358 = vpop.f32.mrf.mxu0
        %v359 = vadd.f32 %v238, %v358
        %360 = vmatmul.f32.gmra.mxu0 %v245
        %v361 = vpop.f32.mrf.mxu0
        %v362 = vadd.f32 %v238, %v361
        %363 = vmatmul.f32.gmra.mxu0 %v248
        %v364 = vpop.f32.mrf.mxu0
        %v365 = vadd.f32 %v238, %v364
        %366 = vmatmul.f32.gmra.mxu0 %v251
        %v367 = vpop.f32.mrf.mxu0
        %v368 = vadd.f32 %v238, %v367
        %369 = vmatmul.f32.gmra.mxu0 %v254
        %v370 = vpop.f32.mrf.mxu0
        %v371 = vadd.f32 %v238, %v370
        %372 = vmatmul.f32.gmra.mxu0 %v257
        %v373 = vpop.f32.mrf.mxu0
        %v374 = vadd.f32 %v238, %v373
        %375 = vmatmul.f32.gmra.mxu0 %v260
        %v376 = vpop.f32.mrf.mxu0
        %v377 = vadd.f32 %v238, %v376
        %378 = vmatmul.f32.gmra.mxu0 %v263
        %v379 = vpop.f32.mrf.mxu0
        %v380 = vadd.f32 %v238, %v379
        %381 = vmatmul.f32.gmra.mxu0 %v266
        %v382 = vpop.f32.mrf.mxu0
        %v383 = vadd.f32 %v238, %v382
        %384 = vmatmul.f32.gmra.mxu0 %v269
        %v385 = vpop.f32.mrf.mxu0
        %v386 = vadd.f32 %v238, %v385
        %387 = vmatmul.f32.gmra.mxu0 %v272
        %v388 = vpop.f32.mrf.mxu0
        %v389 = vadd.f32 %v238, %v388
        %390 = vmatmul.f32.gmra.mxu0 %v275
        %v391 = vpop.f32.mrf.mxu0
        %v392 = vadd.f32 %v238, %v391
        %393 = vmatmul.f32.gmra.mxu0 %v278
        %v394 = vpop.f32.mrf.mxu0
        %v395 = vadd.f32 %v238, %v394
        %396 = vmatmul.f32.gmra.mxu0 %v281
        %v397 = vpop.f32.mrf.mxu0
        %v398 = vadd.f32 %v238, %v397
        %399 = vmatmul.f32.gmra.mxu0 %v284
        %v400 = vpop.f32.mrf.mxu0
        %v401 = vadd.f32 %v238, %v400
        %402 = vmatmul.f32.gmra.mxu0 %v287
        %v403 = vpop.f32.mrf.mxu0
        %v404 = vadd.f32 %v238, %v403
        %405 = vmatmul.f32.gmra.mxu0 %v290
        %v406 = vpop.f32.mrf.mxu0
        %v407 = vadd.f32 %v238, %v406
        %408 = vmatmul.f32.gmra.mxu0 %v293
        %v409 = vpop.f32.mrf.mxu0
        %v410 = vadd.f32 %v238, %v409
        %411 = vmatmul.f32.gmra.mxu0 %v296
        %v412 = vpop.f32.mrf.mxu0
        %v413 = vadd.f32 %v238, %v412
        %414 = vmatmul.f32.gmra.mxu0 %v299
        %v415 = vpop.f32.mrf.mxu0
        %v416 = vadd.f32 %v238, %v415
        %417 = vmatmul.f32.gmra.mxu0 %v302
        %v418 = vpop.f32.mrf.mxu0
        %v419 = vadd.f32 %v238, %v418
        %420 = vmatmul.f32.gmra.mxu0 %v305
        %v421 = vpop.f32.mrf.mxu0
        %v422 = vadd.f32 %v238, %v421
        %423 = vmatmul.f32.gmra.mxu0 %v308
        %v424 = vpop.f32.mrf.mxu0
        %v425 = vadd.f32 %v238, %v424
        %426 = vmatmul.f32.gmra.mxu0 %v311
        %v427 = vpop.f32.mrf.mxu0
        %v428 = vadd.f32 %v238, %v427
        %429 = vmatmul.f32.gmra.mxu0 %v314
        %v430 = vpop.f32.mrf.mxu0
        %v431 = vadd.f32 %v238, %v430
        %432 = vmatmul.f32.gmra.mxu0 %v317
        %v433 = vpop.f32.mrf.mxu0
        %v434 = vadd.f32 %v238, %v433
        %435 = vmatmul.f32.gmra.mxu0 %v320
        %v436 = vpop.f32.mrf.mxu0
        %v437 = vadd.f32 %v238, %v436
        %438 = vmatmul.f32.gmra.mxu0 %v323
        %v439 = vpop.f32.mrf.mxu0
        %v440 = vadd.f32 %v238, %v439
        %441 = vmatmul.f32.gmra.mxu0 %v326
        %v442 = vpop.f32.mrf.mxu0
        %v443 = vadd.f32 %v238, %v442
        %444 = vmatmul.f32.gmra.mxu0 %v329
        %v445 = vpop.f32.mrf.mxu0
        %v446 = vadd.f32 %v238, %v445
        %447 = vmatmul.f32.gmra.mxu0 %v332
        %v448 = vpop.f32.mrf.mxu0
        %v449 = vadd.f32 %v238, %v448
        %450 = vmatmul.f32.gmra.mxu0 %v335
        %v451 = vpop.f32.mrf.mxu0
        %v452 = vadd.f32 %v238, %v451
        %453 = vdwg.mxu0
        %454 = vst [vmem:[%s190] sm:$0xff] %v359
        %455 = vst [vmem:[%s190 + $0x8] sm:$0xff] %v362
        %456 = vst [vmem:[%s190 + $0x10] sm:$0xff] %v365
        %457 = vst [vmem:[%s190 + $0x18] sm:$0xff] %v368
        %458 = vst [vmem:[%s190 + $0x20] sm:$0xff] %v371
        %459 = vst [vmem:[%s190 + $0x28] sm:$0xff] %v374
        %460 = vst [vmem:[%s190 + $0x30] sm:$0xff] %v377
        %461 = vst [vmem:[%s190 + $0x38] sm:$0xff] %v380
        %462 = vst [vmem:[%s190 + $0x40] sm:$0xff] %v383
        %463 = vst [vmem:[%s190 + $0x48] sm:$0xff] %v386
        %464 = vst [vmem:[%s190 + $0x50] sm:$0xff] %v389
        %465 = vst [vmem:[%s190 + $0x58] sm:$0xff] %v392
        %466 = vst [vmem:[%s190 + $0x60] sm:$0xff] %v395
        %467 = vst [vmem:[%s190 + $0x68] sm:$0xff] %v398
        %468 = vst [vmem:[%s190 + $0x70] sm:$0xff] %v401
        %469 = vst [vmem:[%s190 + $0x78] sm:$0xff] %v404
        %470 = vst [vmem:[%s190 + $0x80] sm:$0xff] %v407
        %471 = vst [vmem:[%s190 + $0x88] sm:$0xff] %v410
        %472 = vst [vmem:[%s190 + $0x90] sm:$0xff] %v413
        %473 = vst [vmem:[%s190 + $0x98] sm:$0xff] %v416
        %474 = vst [vmem:[%s190 + $0xa0] sm:$0xff] %v419
        %475 = vst [vmem:[%s190 + $0xa8] sm:$0xff] %v422
        %476 = vst [vmem:[%s190 + $0xb0] sm:$0xff] %v425
        %477 = vst [vmem:[%s190 + $0xb8] sm:$0xff] %v428
        %478 = vst [vmem:[%s190 + $0xc0] sm:$0xff] %v431
        %479 = vst [vmem:[%s190 + $0xc8] sm:$0xff] %v434
        %480 = vst [vmem:[%s190 + $0xd0] sm:$0xff] %v437
        %481 = vst [vmem:[%s190 + $0xd8] sm:$0xff] %v440
        %482 = vst [vmem:[%s190 + $0xe0] sm:$0xff] %v443
        %483 = vst [vmem:[%s190 + $0xe8] sm:$0xff] %v446
        %484 = vst [vmem:[%s190 + $0xf0] sm:$0xff] %v449
        %485 = vst [vmem:[%s190 + $0xf8] sm:$0xff] %v452
        %s486 = sand.u32 %s109, 1
        %s487 = scalar_lea.sflag [#allocation3], %s486
        %s488 = sand.u32 %s109, 1
        %s489 = smul.addr %s488, 256
        %s490 = scalar_lea.vmem [#allocation2], %s489
        // Predicated region
        $region33: #{tpu_custom_call.1} parent=31 // pred_check
          %p491 = pneg %p119
        $region34: #{tpu_custom_call.1} parent=31 // pred_check_branch
          %493 = sbr.rel (%p491) target = $region36
        $region35: #{tpu_custom_call.1} parent=31 // pred_region
          %s494 = smul.u32 16, %s22
          %496 = vsyncadd %s487, 0
          %s497 = smul.addr %s494, 2
          %s498 = smul.addr %s21, 32
          %s499 = sadd.s32 %s497, %s498
          %s500 = smul.addr %s499, 8
          %s501 = scalar_lea.hbm %s3, %s500
          %s502 = sshll.u32 %s490, 4
          %s503 = int_to_ptr.vmem [resolvable:$true] %s502
          %s504 = sshll.u32 %s501, 4
          %s505 = int_to_ptr.hbm [resolvable:$true] %s504
          %510 = dma.vmem_to_hbm [thread:$0]  %s503, 4096, %s505, %s487, 128, 128, 8
        $region36: #{tpu_custom_call.1} parent=31 // pred_fallthru
          _
      $region32: #{tpu_custom_call.1} parent=5 // pred_fallthru
        _
      %p511 = scmp.le.s32.totalorder 2, %s12
      // Predicated region
      $region37: #{tpu_custom_call.1} parent=5 // pred_check
        %p512 = pneg %p511
      $region38: #{tpu_custom_call.1} parent=5 // pred_check_branch
        %514 = sbr.rel (%p512) target = $region40
      $region39: #{tpu_custom_call.1} parent=5 // pred_region
        %s515 = ssub.s32 %s12, 2
        // Predicated region
        $region41: #{tpu_custom_call.1} parent=39 // pred_check
          %p516 = pneg %p125
        $region42: #{tpu_custom_call.1} parent=39 // pred_check_branch
          %518 = sbr.rel (%p516) target = $region44
        $region43: #{tpu_custom_call.1} parent=39 // pred_region
          %s519 = sand.u32 %s110, 1
          %s520 = scalar_lea.sflag [#allocation3], %s519
          %s521 = sand.u32 %s110, 1
          %s522 = smul.addr %s521, 256
          %s523 = scalar_lea.vmem [#allocation2], %s522
          %525 = dma.done %s520, 4096
        $region44: #{tpu_custom_call.1} parent=39 // pred_fallthru
          _
      $region40: #{tpu_custom_call.1} parent=5 // pred_fallthru
        _
    $region6: #{tpu_custom_call.1} parent=1 // loop_footer
      %s16 = sadd.s32 1, %s12
    $region7: #{tpu_custom_call.1} parent=1 // loop_footer_branch
      %11 = sbr.rel target = $region3
    $region8: #{tpu_custom_call.1} parent=1 // loop_exit
      _
    %526 = vsyncpa [#allocation3], 1
    %s527 = scalar_lea.sflag [#allocation3], 1
    %528 = vsyncpa %s527, 1

</llo_original>
